<compile_context>
chip_gen: v7x
topology: tpu7x:2x2x1
jax: 0.10.0
libtpu: 0.0.40
codegen_flags: <defaults>
</compile_context>

<pallas_src>
import functools
import math

import jax
import jax.numpy as jnp
from jax.experimental import pallas as pl
from jax.experimental.pallas import tpu as pltpu

NEG_SLOPE = 0.01      # PyTorch F.leaky_relu default negative_slope
NEG_BIG = -1e30       # finite mask sentinel (keep in f32; overflows in bf16)


def _round_up(x, m):
    return ((x + m - 1) // m) * m


def _pick_tile(n, desired, min_tiles=1):
    """Largest multiple of 128 that divides n, is <= desired and (when possible)
    leaves at least `min_tiles` tiles. n must be a multiple of 128."""
    best = 128
    t = 256
    while t <= min(desired, n):
        if n % t == 0 and n // t >= min_tiles:
            best = t
        t += 128
    return best


def _vmem_limit_bytes():
    """Generation-aware VMEM budget with headroom (48MiB on v7x, ~96MiB on v5e/v6e)."""
    cap = 64 * 1024 * 1024          # pessimistic default (v7x per-TC physical)
    try:
        info = pltpu.get_tpu_info()
        cap = int(getattr(info, "vmem_capacity_bytes", cap))
    except Exception:
        pass
    return max(32 << 20, min(int(cap * 0.75), cap - (16 << 20)))


# --------------------------------------------------------------------------- #
# Kernel 1: projection prologue                                               #
# --------------------------------------------------------------------------- #
def gat_proj_kernel(h_ref, wfc_t_ref, a_src_ref, a_dst_ref, z_ref, s_ref, d_ref):
    # h_ref:     (row_tile, in_dim) bf16
    # wfc_t_ref: (in_dim, D)        bf16   (fc weight, transposed & lane-padded)
    # a_src_ref: (1, D)             f32
    # a_dst_ref: (1, D)             f32
    # z_ref:     (row_tile, D)      bf16   (output, consumed by aggregation MXU)
    # s_ref:     (1, row_tile)      f32    (output, src score, LANE-dense)
    # d_ref:     (row_tile, 1)      f32    (output, dst score, sublane column)
    z = jnp.dot(h_ref[...], wfc_t_ref[...], preferred_element_type=jnp.float32)
    # s lane-dense: contract last dims (1,D)x(row_tile,D) -> (1,row_tile), no transpose.
    s_ref[...] = jnp.einsum("od,td->ot", a_src_ref[...], z,
                            preferred_element_type=jnp.float32)
    d_ref[...] = jnp.sum(z * a_dst_ref[...], axis=-1, keepdims=True)
    z_ref[...] = z.astype(z_ref.dtype)


# --------------------------------------------------------------------------- #
# Kernel 2: masked online-softmax aggregation                                 #
# --------------------------------------------------------------------------- #
def gat_agg_kernel(adj_ref, z_ref, s_ref, d_ref, out_ref, m_sc, l_sc, acc_sc,
                   *, src_tile, z_resident):
    # adj_ref: (dst_tile, src_tile) int8   adjacency (dst, src) tile
    # z_ref:   (Np, D) bf16 if z_resident else (src_tile, D) bf16
    # s_ref:   (1, src_tile)        f32    src scores (lane-broadcast row)
    # d_ref:   (dst_tile, 1)        f32    dst scores (sublane-broadcast col)
    # out_ref: (dst_tile, D)        f32
    # scratch: m_sc/l_sc (dst_tile, 1) f32, acc_sc (dst_tile, D) f32
    si = pl.program_id(1)

    @pl.when(si == 0)
    def _():
        m_sc[...] = jnp.full(m_sc.shape, NEG_BIG, jnp.float32)
        l_sc[...] = jnp.zeros(l_sc.shape, jnp.float32)
        acc_sc[...] = jnp.zeros(acc_sc.shape, jnp.float32)

    if z_resident:
        start = pl.multiple_of(si * src_tile, src_tile)
        z_blk = z_ref[pl.ds(start, src_tile), :]
    else:
        z_blk = z_ref[...]

    mask = adj_ref[...] > 0                              # (dst_tile, src_tile)
    e = d_ref[...] + s_ref[...]                          # (dst_tile, src_tile)
    e = jnp.where(e > 0, e, NEG_SLOPE * e)               # leaky_relu
    e = jnp.where(mask, e, jnp.float32(NEG_BIG))         # mask for the row max

    m_prev = m_sc[...]
    m_new = jnp.maximum(m_prev, jnp.max(e, axis=-1, keepdims=True))
    corr = jnp.exp(m_prev - m_new)                       # rescale previous partials
    # Second mask-select is load-bearing: fully-masked rows have e == m_new.
    p = jnp.where(mask, jnp.exp(e - m_new), 0.0)         # unnormalized alpha, f32

    l_sc[...] = corr * l_sc[...] + jnp.sum(p, axis=-1, keepdims=True)
    acc_sc[...] = corr * acc_sc[...] + jnp.dot(
        p.astype(jnp.bfloat16), z_blk, preferred_element_type=jnp.float32)
    m_sc[...] = m_new

    @pl.when(si == pl.num_programs(1) - 1)
    def _():
        l = l_sc[...]
        out = acc_sc[...] * pl.reciprocal(l, approx=True)
        # Zero-indegree dst nodes: emit zeros explicitly instead of NaN.
        out_ref[...] = jnp.where(l > 0, out, 0.0).astype(out_ref.dtype)


def _adj_block_spec(dst_t, src_t):
    idx = lambda j, i: (j, i)
    # adj is the only stream whose block index changes every grid step; a third
    # buffer hides its DMA latency at dst_t*src_t bytes extra VMEM.
    if hasattr(pl, "Buffered"):
        try:
            return pl.BlockSpec((dst_t, src_t), idx, pipeline_mode=pl.Buffered(3))
        except TypeError:
            pass
    return pl.BlockSpec((dst_t, src_t), idx)


# --------------------------------------------------------------------------- #
# Adjacency preparation (static per graph -- cache & reuse across calls)      #
# --------------------------------------------------------------------------- #
def prepare_adjacency(adj, n_pad):
    """Pad to (n_pad, n_pad), transpose to (dst, src) layout and cast to int8."""
    n = adj.shape[0]
    return jnp.zeros((n_pad, n_pad), jnp.int8).at[:n, :n].set(
        (adj > 0).astype(jnp.int8).T)


# --------------------------------------------------------------------------- #
# Wrapper                                                                     #
# --------------------------------------------------------------------------- #
def gat_forward(h, adj, w_fc, w_attn, *, adj_prepared=None,
                dst_tile=256, src_tile=256, row_tile=512):
    """h: (N, in_dim); adj: (N, N) with adj[i, j]=1 iff edge i->j;
    w_fc: (out_dim, in_dim); w_attn: (1, 2*out_dim).
    adj_prepared: optional cached output of prepare_adjacency(adj, round_up(N,128))."""
    N, in_dim = h.shape
    out_dim = w_fc.shape[0]

    D = _round_up(out_dim, 128)                 # lane-dense feature dim
    Np = _round_up(N, 128)                      # pad only to 128; tiles divide Np

    vmem_limit = _vmem_limit_bytes()

    # Tile choices: multiples of 128 dividing Np. Keep >=2 dst tiles when possible
    # so the "parallel" dst axis can shard across both TensorCores (v7x).
    dst_t = _pick_tile(Np, dst_tile, min_tiles=2)
    src_t = _pick_tile(Np, src_tile)
    row_t = _pick_tile(Np, row_tile)

    # ---- pad / lay out inputs ---------------------------------------------
    h_p = jnp.zeros((Np, in_dim), jnp.bfloat16).at[:N].set(h.astype(jnp.bfloat16))
    wfc_t = jnp.zeros((in_dim, D), jnp.bfloat16).at[:, :out_dim].set(
        w_fc.T.astype(jnp.bfloat16))
    a_src = jnp.zeros((1, D), jnp.float32).at[0, :out_dim].set(
        w_attn[0, :out_dim].astype(jnp.float32))
    a_dst = jnp.zeros((1, D), jnp.float32).at[0, :out_dim].set(
        w_attn[0, out_dim:].astype(jnp.float32))
    adj_t = adj_prepared if adj_prepared is not None else prepare_adjacency(adj, Np)

    # ---- kernel 1: z, s, d -------------------------------------------------
    z, s_row, d_col = pl.pallas_call(
        gat_proj_kernel,
        out_shape=(jax.ShapeDtypeStruct((Np, D), jnp.bfloat16),
                   jax.ShapeDtypeStruct((1, Np), jnp.float32),
                   jax.ShapeDtypeStruct((Np, 1), jnp.float32)),
        grid_spec=pltpu.PrefetchScalarGridSpec(
            num_scalar_prefetch=0,
            grid=(Np // row_t,),
            in_specs=[pl.BlockSpec((row_t, in_dim), lambda r: (r, 0)),
                      pl.BlockSpec((in_dim, D), lambda r: (0, 0)),
                      pl.BlockSpec((1, D), lambda r: (0, 0)),
                      pl.BlockSpec((1, D), lambda r: (0, 0))],
            out_specs=[pl.BlockSpec((row_t, D), lambda r: (r, 0)),
                       pl.BlockSpec((1, row_t), lambda r: (0, r)),
                       pl.BlockSpec((row_t, 1), lambda r: (r, 0))]),
        compiler_params=pltpu.CompilerParams(
            dimension_semantics=("parallel",)),
    )(h_p, wfc_t, a_src, a_dst)

    # ---- decide whether z can stay resident in VMEM for kernel 2 -----------
    step_bytes = (3 * dst_t * src_t              # adj tiles (int8, triple-buffered)
                  + 2 * dst_t * D * 4            # out tile (double-buffered)
                  + dst_t * D * 4                # acc scratch
                  + 6 * dst_t * src_t * 4)       # e/p/mask temporaries (estimate)
    z_resident = (2 * Np * D * 2 + step_bytes + (4 << 20)) <= vmem_limit

    if z_resident:
        # Whole z DMA'd once (constant block index) -> no O(N^2/dst_tile) re-stream.
        z_spec = pl.BlockSpec((Np, D), lambda j, i: (0, 0))
    else:
        z_spec = pl.BlockSpec((src_t, D), lambda j, i: (i, 0))

    agg_kernel = functools.partial(gat_agg_kernel,
                                   src_tile=src_t, z_resident=z_resident)

    # ---- kernel 2: masked online softmax + aggregation ---------------------
    out = pl.pallas_call(
        agg_kernel,
        out_shape=jax.ShapeDtypeStruct((Np, D), jnp.float32),
        grid_spec=pltpu.PrefetchScalarGridSpec(
            num_scalar_prefetch=0,
            grid=(Np // dst_t, Np // src_t),     # (dst: parallel, src: arbitrary)
            in_specs=[_adj_block_spec(dst_t, src_t),
                      z_spec,
                      pl.BlockSpec((1, src_t), lambda j, i: (0, i)),
                      pl.BlockSpec((dst_t, 1), lambda j, i: (j, 0))],
            out_specs=pl.BlockSpec((dst_t, D), lambda j, i: (j, 0)),
            scratch_shapes=[pltpu.VMEM((dst_t, 1), jnp.float32),   # running max
                            pltpu.VMEM((dst_t, 1), jnp.float32),   # running denom
                            pltpu.VMEM((dst_t, D), jnp.float32)]), # running acc
        compiler_params=pltpu.CompilerParams(
            dimension_semantics=("parallel", "arbitrary"),
            vmem_limit_bytes=vmem_limit),
    )(adj_t, z, s_row, d_col)

    return out[:N, :out_dim]


# --------------------------------------------------------------------------- #
# Plain-JAX reference (matches the PyTorch module semantics)                  #
# --------------------------------------------------------------------------- #
def gat_reference(h, adj, w_fc, w_attn):
    out_dim = w_fc.shape[0]
    z = h @ w_fc.T
    a_src = w_attn[0, :out_dim]
    a_dst = w_attn[0, out_dim:]
    s = z @ a_src
    d = z @ a_dst
    e = s[:, None] + d[None, :]                      # (src, dst)
    e = jnp.where(e > 0, e, NEG_SLOPE * e)
    e = jnp.where(adj > 0, e, NEG_BIG)
    e_max = jnp.max(e, axis=0, keepdims=True)
    p = jnp.where(adj > 0, jnp.exp(e - e_max), 0.0)
    alpha = p / jnp.sum(p, axis=0, keepdims=True)
    return alpha.T @ z


if __name__ == "__main__":
    # Small but tiling-exercising shapes: 256 nodes -> 128-dst x 256-src tiles.
    N, in_dim, out_dim = 256, 64, 32

    key = jax.random.PRNGKey(0)
    k_h, k_fc, k_attn = jax.random.split(key, 3)

    h = jax.random.normal(k_h, (N, in_dim), dtype=jnp.float32)
    # "nn.Linear" weights, PyTorch layout (out, in)
    w_fc = jax.random.normal(k_fc, (out_dim, in_dim), dtype=jnp.float32) * 0.1
    w_attn = jax.random.normal(k_attn, (1, 2 * out_dim), dtype=jnp.float32) * 0.1

    # Deterministic graph: self-loop + ring edge i -> (i+1) % N  (indegree >= 2).
    idx = jnp.arange(N)
    adj = jnp.zeros((N, N), dtype=jnp.float32)
    adj = adj.at[idx, idx].set(1.0)
    adj = adj.at[idx, (idx + 1) % N].set(1.0)

    # Adjacency relayout is static per graph: prepare once, reuse across calls.
    adj_prepared = jax.block_until_ready(prepare_adjacency(adj, _round_up(N, 128)))

    out = gat_forward(h, adj, w_fc, w_attn, adj_prepared=adj_prepared)
    out = jax.block_until_ready(out)

    ref = gat_reference(h, adj, w_fc, w_attn)
    assert out.shape == (N, out_dim)
    # bf16 MXU operands (projection + p@z) and approx reciprocal limit accuracy
    # to ~1e-2 relative; fine for inference, hence the modest tolerance.
    assert jnp.allclose(out, ref, atol=2.5e-2, rtol=2.5e-2), "mismatch vs reference"

    print("KERNEL_OK")
</pallas_src>

<mosaic_0001>
module attributes {stable_mosaic.version = 11 : i64} {
  func.func @gat_proj_kernel(%arg0: i32, %arg1: memref<256x64xbf16, #tpu.memory_space<vmem>>, %arg2: memref<64x128xbf16, #tpu.memory_space<vmem>>, %arg3: memref<1x128xf32, #tpu.memory_space<vmem>>, %arg4: memref<1x128xf32, #tpu.memory_space<vmem>>, %arg5: memref<256x128xbf16, #tpu.memory_space<vmem>>, %arg6: memref<1x256xf32, #tpu.memory_space<vmem>>, %arg7: memref<256x1xf32, #tpu.memory_space<vmem>>) attributes {dimension_semantics = [#tpu.dimension_semantics<parallel>], iteration_bounds = array<i64: 1>, scalar_prefetch = 0 : i64, scratch_operands = 0 : i64, tpu.core_type = #tpu.core_type<tc>, window_params = [{transform_indices = @transform_0, window_bounds = array<i64: 256, 64>}, {pipeline_mode = #tpu.pipeline_mode<synchronous>, transform_indices = @transform_1, window_bounds = array<i64: 64, 128>}, {pipeline_mode = #tpu.pipeline_mode<synchronous>, transform_indices = @transform_2, window_bounds = array<i64: 1, 128>}, {pipeline_mode = #tpu.pipeline_mode<synchronous>, transform_indices = @transform_3, window_bounds = array<i64: 1, 128>}, {transform_indices = @transform_4, window_bounds = array<i64: 256, 128>}, {transform_indices = @transform_5, window_bounds = array<i64: 1, 256>}, {transform_indices = @transform_6, window_bounds = array<i64: 256, 1>}]} {
    %c0 = arith.constant 0 : index
    %c0_0 = arith.constant 0 : index
    %0 = vector.load %arg1[%c0, %c0_0] : memref<256x64xbf16, #tpu.memory_space<vmem>>, vector<256x64xbf16>
    %c0_1 = arith.constant 0 : index
    %c0_2 = arith.constant 0 : index
    %1 = vector.load %arg2[%c0_1, %c0_2] : memref<64x128xbf16, #tpu.memory_space<vmem>>, vector<64x128xbf16>
    %cst = arith.constant dense<0.000000e+00> : vector<256x128xf32>
    %2 = tpu.matmul %0, %1, %cst {dimension_numbers = #tpu.dot_dimension_numbers<[1], [0], [0], [1], [0, 0, 1, 1], [], []>} : vector<256x64xbf16>, vector<64x128xbf16>, vector<256x128xf32> -> vector<256x128xf32>
    %c0_3 = arith.constant 0 : index
    %c0_4 = arith.constant 0 : index
    %3 = vector.load %arg3[%c0_3, %c0_4] : memref<1x128xf32, #tpu.memory_space<vmem>>, vector<1x128xf32>
    "tpu.trace_start"() <{level = 10 : i32, message = "od,td->ot"}> : () -> ()
    %cst_5 = arith.constant dense<0.000000e+00> : vector<1x256xf32>
    %4 = tpu.matmul %3, %2, %cst_5 {dimension_numbers = #tpu.dot_dimension_numbers<[1], [1], [0], [0], [0, 0, 1, 0], [], []>} : vector<1x128xf32>, vector<256x128xf32>, vector<1x256xf32> -> vector<1x256xf32>
    "tpu.trace_stop"() : () -> ()
    %c0_6 = arith.constant 0 : index
    %c0_7 = arith.constant 0 : index
    %5 = vector.load %arg6[%c0_6, %c0_7] : memref<1x256xf32, #tpu.memory_space<vmem>>, vector<1x256xf32>
    tpu.vector_store %arg6[%c0_6, %c0_7], %4 {strides = array<i32>} : memref<1x256xf32, #tpu.memory_space<vmem>>, vector<1x256xf32>,
    %c0_8 = arith.constant 0 : index
    %c0_9 = arith.constant 0 : index
    %6 = vector.load %arg4[%c0_8, %c0_9] : memref<1x128xf32, #tpu.memory_space<vmem>>, vector<1x128xf32>
    %7 = vector.broadcast %6 : vector<1x128xf32> to vector<256x128xf32>
    %8 = arith.mulf %2, %7 : vector<256x128xf32>
    %cst_10 = arith.constant dense<0.000000e+00> : vector<256xf32>
    %9 = vector.multi_reduction <add>, %8, %cst_10 [1] : vector<256x128xf32> to vector<256xf32>
    %10 = vector.shape_cast %9 : vector<256xf32> to vector<256x1xf32>
    %c0_11 = arith.constant 0 : index
    %c0_12 = arith.constant 0 : index
    %11 = vector.load %arg7[%c0_11, %c0_12] : memref<256x1xf32, #tpu.memory_space<vmem>>, vector<256x1xf32>
    tpu.vector_store %arg7[%c0_11, %c0_12], %10 {strides = array<i32>} : memref<256x1xf32, #tpu.memory_space<vmem>>, vector<256x1xf32>,
    %12 = arith.truncf %2 : vector<256x128xf32> to vector<256x128xbf16>
    %c0_13 = arith.constant 0 : index
    %c0_14 = arith.constant 0 : index
    %13 = vector.load %arg5[%c0_13, %c0_14] : memref<256x128xbf16, #tpu.memory_space<vmem>>, vector<256x128xbf16>
    tpu.vector_store %arg5[%c0_13, %c0_14], %12 {strides = array<i32>} : memref<256x128xbf16, #tpu.memory_space<vmem>>, vector<256x128xbf16>,
    return
  }
  func.func @transform_0(%arg0: i32) -> (i32, i32) {
    %c0_i32 = arith.constant 0 : i32
    %c0_i32_0 = arith.constant 0 : i32
    return %arg0, %c0_i32 : i32, i32
  }
  func.func @transform_1(%arg0: i32) -> (i32, i32) {
    %c0_i32 = arith.constant 0 : i32
    %c0_i32_0 = arith.constant 0 : i32
    %c0_i32_1 = arith.constant 0 : i32
    return %c0_i32, %c0_i32_0 : i32, i32
  }
  func.func @transform_2(%arg0: i32) -> (i32, i32) {
    %c0_i32 = arith.constant 0 : i32
    %c0_i32_0 = arith.constant 0 : i32
    %c0_i32_1 = arith.constant 0 : i32
    return %c0_i32, %c0_i32_0 : i32, i32
  }
  func.func @transform_3(%arg0: i32) -> (i32, i32) {
    %c0_i32 = arith.constant 0 : i32
    %c0_i32_0 = arith.constant 0 : i32
    %c0_i32_1 = arith.constant 0 : i32
    return %c0_i32, %c0_i32_0 : i32, i32
  }
  func.func @transform_4(%arg0: i32) -> (i32, i32) {
    %c0_i32 = arith.constant 0 : i32
    %c0_i32_0 = arith.constant 0 : i32
    return %arg0, %c0_i32 : i32, i32
  }
  func.func @transform_5(%arg0: i32) -> (i32, i32) {
    %c0_i32 = arith.constant 0 : i32
    %c0_i32_0 = arith.constant 0 : i32
    return %c0_i32, %arg0 : i32, i32
  }
  func.func @transform_6(%arg0: i32) -> (i32, i32) {
    %c0_i32 = arith.constant 0 : i32
    %c0_i32_0 = arith.constant 0 : i32
    return %arg0, %c0_i32 : i32, i32
  }
}

</mosaic_0001>

<llo_original>
// kernel: tpu_custom_call.1
$region0: #{tpu_custom_call.1}
  #allocation0 [shape = 'u32[]', space=smem, size = 0x4, offset = 0x4, fixed_abs, tag = 'smem constant byte address 0x4 - core index']
  #allocation1 [shape = 'u32[144,128]{1,0:T(1,128)}', space=vmem, size = 0x12000, scoped, tag = 'internal scratch']
  %s0 = inlined_call_operand.vmem [shape: bf16[256,64], index: 0, kind: input, shape index: {}]
  %s1 = inlined_call_operand.vmem [shape: bf16[64,128], index: 1, kind: input, shape index: {}]
  %s2 = inlined_call_operand.vmem [shape: f32[1,128], index: 2, kind: input, shape index: {}]
  %s3 = inlined_call_operand.vmem [shape: f32[1,128], index: 3, kind: input, shape index: {}]
  %s4 = inlined_call_operand.hbm [shape: bf16[256,128], index: 4, kind: output, shape index: {0}]
  %s5 = inlined_call_operand.hbm [shape: f32[1,256], index: 5, kind: output, shape index: {1}]
  %s6 = inlined_call_operand.vmem [shape: f32[256,1], index: 6, kind: output, shape index: {2}]
  %7 = xla_tuple %s4, %s5, %s6
  %s8 = sld [smem:[#allocation0]]
  $region42: #{tpu_custom_call.1} parent=0
    _
  %s10 = ssub.s32 1, %s8
  %s11 = scalar_select 0, %s10, %s8
  $region1: #{tpu_custom_call.1} parent=0
    #allocation2 [shape = 'u8[65536]{0}', space=vmem, size = 0x10000, scoped, tag = 'output window, operand 0, single buffered']
    #allocation3 [shape = 's32[1]{0}', space=sflag, size = 0x4, scoped, tag = 'scoped memory for tpu_custom_call.1']
    #allocation4 [shape = 'u8[1024]{0}', space=vmem, size = 0x400, scoped, tag = 'output window, operand 1, single buffered']
    #allocation5 [shape = 's32[1]{0}', space=sflag, size = 0x4, scoped, tag = 'scoped memory for tpu_custom_call.1']
    %12 = vsyncpa [#allocation3], 0
    %13 = vsyncpa [#allocation5], 0
    // Predicated region
    $region2: #{tpu_custom_call.1} parent=1 // pred_check
      _
    $region3: #{tpu_custom_call.1} parent=1 // pred_check_branch
      %15 = sbr.rel (0) target = $region5
    $region4: #{tpu_custom_call.1} parent=1 // pred_region
      _
    $region5: #{tpu_custom_call.1} parent=1 // pred_fallthru
      _
    // Predicated region
    $region6: #{tpu_custom_call.1} parent=1 // pred_check
      _
    $region7: #{tpu_custom_call.1} parent=1 // pred_check_branch
      %17 = sbr.rel (0) target = $region9
    $region8: #{tpu_custom_call.1} parent=1 // pred_region
      _
    $region9: #{tpu_custom_call.1} parent=1 // pred_fallthru
      _
    // Predicated region
    $region10: #{tpu_custom_call.1} parent=1 // pred_check
      _
    $region11: #{tpu_custom_call.1} parent=1 // pred_check_branch
      %19 = sbr.rel (0) target = $region13
    $region12: #{tpu_custom_call.1} parent=1 // pred_region
      _
    $region13: #{tpu_custom_call.1} parent=1 // pred_fallthru
      _
    // Predicated region
    $region14: #{tpu_custom_call.1} parent=1 // pred_check
      _
    $region15: #{tpu_custom_call.1} parent=1 // pred_check_branch
      %21 = sbr.rel (0) target = $region17
    $region16: #{tpu_custom_call.1} parent=1 // pred_region
      _
    $region17: #{tpu_custom_call.1} parent=1 // pred_fallthru
      _
    %v23 = vld [vmem:[%s0] sm:$0xf]
    %v24 = vld [vmem:[%s0 + $0x4] sm:$0xf]
    %v25 = vld [vmem:[%s0 + $0x8] sm:$0xf]
    %v26 = vld [vmem:[%s0 + $0xc] sm:$0xf]
    %v27 = vld [vmem:[%s0 + $0x10] sm:$0xf]
    %v28 = vld [vmem:[%s0 + $0x14] sm:$0xf]
    %v29 = vld [vmem:[%s0 + $0x18] sm:$0xf]
    %v30 = vld [vmem:[%s0 + $0x1c] sm:$0xf]
    %v31 = vld [vmem:[%s0 + $0x20] sm:$0xf]
    %v32 = vld [vmem:[%s0 + $0x24] sm:$0xf]
    %v33 = vld [vmem:[%s0 + $0x28] sm:$0xf]
    %v34 = vld [vmem:[%s0 + $0x2c] sm:$0xf]
    %v35 = vld [vmem:[%s0 + $0x30] sm:$0xf]
    %v36 = vld [vmem:[%s0 + $0x34] sm:$0xf]
    %v37 = vld [vmem:[%s0 + $0x38] sm:$0xf]
    %v38 = vld [vmem:[%s0 + $0x3c] sm:$0xf]
    %v39 = vld [vmem:[%s0 + $0x40] sm:$0xf]
    %v40 = vld [vmem:[%s0 + $0x44] sm:$0xf]
    %v41 = vld [vmem:[%s0 + $0x48] sm:$0xf]
    %v42 = vld [vmem:[%s0 + $0x4c] sm:$0xf]
    %v43 = vld [vmem:[%s0 + $0x50] sm:$0xf]
    %v44 = vld [vmem:[%s0 + $0x54] sm:$0xf]
    %v45 = vld [vmem:[%s0 + $0x58] sm:$0xf]
    %v46 = vld [vmem:[%s0 + $0x5c] sm:$0xf]
    %v47 = vld [vmem:[%s0 + $0x60] sm:$0xf]
    %v48 = vld [vmem:[%s0 + $0x64] sm:$0xf]
    %v49 = vld [vmem:[%s0 + $0x68] sm:$0xf]
    %v50 = vld [vmem:[%s0 + $0x6c] sm:$0xf]
    %v51 = vld [vmem:[%s0 + $0x70] sm:$0xf]
    %v52 = vld [vmem:[%s0 + $0x74] sm:$0xf]
    %v53 = vld [vmem:[%s0 + $0x78] sm:$0xf]
    %v54 = vld [vmem:[%s0 + $0x7c] sm:$0xf]
    %v55 = vld [vmem:[%s1] sm:$0xf]
    %v56 = vld [vmem:[%s1 + $0x4] sm:$0xf]
    %v57 = vld [vmem:[%s1 + $0x8] sm:$0xf]
    %v58 = vld [vmem:[%s1 + $0xc] sm:$0xf]
    %v59 = vld [vmem:[%s1 + $0x10] sm:$0xf]
    %v60 = vld [vmem:[%s1 + $0x14] sm:$0xf]
    %v61 = vld [vmem:[%s1 + $0x18] sm:$0xf]
    %v62 = vld [vmem:[%s1 + $0x1c] sm:$0xf]
    %v95 = vunpack.c.l.b16 %v23
    %v96 = vunpack.c.l.b16 %v24
    %v97 = vunpack.c.l.b16 %v25
    %v98 = vunpack.c.l.b16 %v26
    %v99 = vunpack.c.l.b16 %v27
    %v100 = vunpack.c.l.b16 %v28
    %v101 = vunpack.c.l.b16 %v29
    %v102 = vunpack.c.l.b16 %v30
    %v103 = vunpack.c.l.b16 %v31
    %v104 = vunpack.c.l.b16 %v32
    %v105 = vunpack.c.l.b16 %v33
    %v106 = vunpack.c.l.b16 %v34
    %v107 = vunpack.c.l.b16 %v35
    %v108 = vunpack.c.l.b16 %v36
    %v109 = vunpack.c.l.b16 %v37
    %v110 = vunpack.c.l.b16 %v38
    %v111 = vunpack.c.l.b16 %v39
    %v112 = vunpack.c.l.b16 %v40
    %v113 = vunpack.c.l.b16 %v41
    %v114 = vunpack.c.l.b16 %v42
    %v115 = vunpack.c.l.b16 %v43
    %v116 = vunpack.c.l.b16 %v44
    %v117 = vunpack.c.l.b16 %v45
    %v118 = vunpack.c.l.b16 %v46
    %v119 = vunpack.c.l.b16 %v47
    %v120 = vunpack.c.l.b16 %v48
    %v121 = vunpack.c.l.b16 %v49
    %v122 = vunpack.c.l.b16 %v50
    %v123 = vunpack.c.l.b16 %v51
    %v124 = vunpack.c.l.b16 %v52
    %v125 = vunpack.c.l.b16 %v53
    %v126 = vunpack.c.l.b16 %v54
    %v127 = vpack.c.b16 %v96, %v95
    %v128 = vpack.c.b16 %v98, %v97
    %v129 = vpack.c.b16 %v100, %v99
    %v130 = vpack.c.b16 %v102, %v101
    %v131 = vpack.c.b16 %v104, %v103
    %v132 = vpack.c.b16 %v106, %v105
    %v133 = vpack.c.b16 %v108, %v107
    %v134 = vpack.c.b16 %v110, %v109
    %v135 = vpack.c.b16 %v112, %v111
    %v136 = vpack.c.b16 %v114, %v113
    %v137 = vpack.c.b16 %v116, %v115
    %v138 = vpack.c.b16 %v118, %v117
    %v139 = vpack.c.b16 %v120, %v119
    %v140 = vpack.c.b16 %v122, %v121
    %v141 = vpack.c.b16 %v124, %v123
    %v142 = vpack.c.b16 %v126, %v125
    %v151 = vunpack.c.l.b16 %v55
    %v152 = vunpack.c.l.b16 %v56
    %v153 = vunpack.c.l.b16 %v57
    %v154 = vunpack.c.l.b16 %v58
    %v155 = vunpack.c.l.b16 %v59
    %v156 = vunpack.c.l.b16 %v60
    %v157 = vunpack.c.l.b16 %v61
    %v158 = vunpack.c.l.b16 %v62
    %v159 = vpack.c.b16 %v152, %v151
    %v160 = vpack.c.b16 %v154, %v153
    %v161 = vpack.c.b16 %v156, %v155
    %v162 = vpack.c.b16 %v158, %v157
    %vm167 = vcmask 523264
    %v169 = vsel %vm167, %v127, 0
    %v172 = vsel %vm167, %v128, 0
    %v175 = vsel %vm167, %v129, 0
    %v178 = vsel %vm167, %v130, 0
    %v181 = vsel %vm167, %v131, 0
    %v184 = vsel %vm167, %v132, 0
    %v187 = vsel %vm167, %v133, 0
    %v190 = vsel %vm167, %v134, 0
    %v193 = vsel %vm167, %v135, 0
    %v196 = vsel %vm167, %v136, 0
    %v199 = vsel %vm167, %v137, 0
    %v202 = vsel %vm167, %v138, 0
    %v205 = vsel %vm167, %v139, 0
    %v208 = vsel %vm167, %v140, 0
    %v211 = vsel %vm167, %v141, 0
    %v214 = vsel %vm167, %v142, 0
    %216 = vmatprep.subr.bf16.mxu0 0
    %217 = vmatpush1.bf16.msra.mxu0 %v159
    %218 = vmatprep.subr.bf16.mxu0 0
    %219 = vmatpush1.bf16.msra.mxu0 %v160
    %220 = vmatprep.subr.bf16.mxu0 0
    %221 = vmatpush1.bf16.msra.mxu0 %v161
    %222 = vmatprep.subr.bf16.mxu0 0
    %223 = vmatpush1.bf16.msra.mxu0 %v162
    %224 = vmatprep.subr.bf16.mxu0 0
    %225 = vmatpush1.bf16.msra.mxu0 0
    %226 = vmatprep.subr.bf16.mxu0 0
    %227 = vmatpush1.bf16.msra.mxu0 0
    %228 = vmatprep.subr.bf16.mxu0 0
    %229 = vmatpush1.bf16.msra.mxu0 0
    %230 = vmatprep.subr.bf16.mxu0 0
    %231 = vmatpush1.bf16.msra.mxu0 0
    %232 = vmatprep.subr.bf16.mxu0 0
    %233 = vmatpush1.bf16.msra.mxu0 0
    %234 = vmatprep.subr.bf16.mxu0 0
    %235 = vmatpush1.bf16.msra.mxu0 0
    %236 = vmatprep.subr.bf16.mxu0 0
    %237 = vmatpush1.bf16.msra.mxu0 0
    %238 = vmatprep.subr.bf16.mxu0 0
    %239 = vmatpush1.bf16.msra.mxu0 0
    %240 = vmatprep.subr.bf16.mxu0 0
    %241 = vmatpush1.bf16.msra.mxu0 0
    %242 = vmatprep.subr.bf16.mxu0 0
    %243 = vmatpush1.bf16.msra.mxu0 0
    %244 = vmatprep.subr.bf16.mxu0 0
    %245 = vmatpush1.bf16.msra.mxu0 0
    %246 = vmatprep.subr.bf16.mxu0 0
    %247 = vmatpush1.bf16.msra.mxu0 0
    %248 = vmatprep.mubr.bf16.mxu0 0
    %249 = vmatmul.mubr.bf16.gmra.mrb[0].mxu0 %v169
    %v250 = vpop.f32.mrb[0].mxu0
    %v251 = vadd.f32 0.0, %v250
    %v252 = vpop.f32.mrb[0].mxu0
    %v253 = vpop.f32.mrb[0].mxu0
    %v254 = vadd.f32 0.0, %v253
    %v255 = vpop.f32.mrb[0].mxu0
    %256 = vmatprep.mubr.bf16.mxu0 0
    %257 = vmatmul.mubr.bf16.gmra.mrb[0].mxu0 %v172
    %v258 = vpop.f32.mrb[0].mxu0
    %v259 = vadd.f32 0.0, %v258
    %v260 = vpop.f32.mrb[0].mxu0
    %v261 = vpop.f32.mrb[0].mxu0
    %v262 = vadd.f32 0.0, %v261
    %v263 = vpop.f32.mrb[0].mxu0
    %264 = vmatprep.mubr.bf16.mxu0 0
    %265 = vmatmul.mubr.bf16.gmra.mrb[0].mxu0 %v175
    %v266 = vpop.f32.mrb[0].mxu0
    %v267 = vadd.f32 0.0, %v266
    %v268 = vpop.f32.mrb[0].mxu0
    %v269 = vpop.f32.mrb[0].mxu0
    %v270 = vadd.f32 0.0, %v269
    %v271 = vpop.f32.mrb[0].mxu0
    %272 = vmatprep.mubr.bf16.mxu0 0
    %273 = vmatmul.mubr.bf16.gmra.mrb[0].mxu0 %v178
    %v274 = vpop.f32.mrb[0].mxu0
    %v275 = vadd.f32 0.0, %v274
    %v276 = vpop.f32.mrb[0].mxu0
    %v277 = vpop.f32.mrb[0].mxu0
    %v278 = vadd.f32 0.0, %v277
    %v279 = vpop.f32.mrb[0].mxu0
    %280 = vmatprep.mubr.bf16.mxu0 0
    %281 = vmatmul.mubr.bf16.gmra.mrb[0].mxu0 %v181
    %v282 = vpop.f32.mrb[0].mxu0
    %v283 = vadd.f32 0.0, %v282
    %v284 = vpop.f32.mrb[0].mxu0
    %v285 = vpop.f32.mrb[0].mxu0
    %v286 = vadd.f32 0.0, %v285
    %v287 = vpop.f32.mrb[0].mxu0
    %288 = vmatprep.mubr.bf16.mxu0 0
    %289 = vmatmul.mubr.bf16.gmra.mrb[0].mxu0 %v184
    %v290 = vpop.f32.mrb[0].mxu0
    %v291 = vadd.f32 0.0, %v290
    %v292 = vpop.f32.mrb[0].mxu0
    %v293 = vpop.f32.mrb[0].mxu0
    %v294 = vadd.f32 0.0, %v293
    %v295 = vpop.f32.mrb[0].mxu0
    %296 = vmatprep.mubr.bf16.mxu0 0
    %297 = vmatmul.mubr.bf16.gmra.mrb[0].mxu0 %v187
    %v298 = vpop.f32.mrb[0].mxu0
    %v299 = vadd.f32 0.0, %v298
    %v300 = vpop.f32.mrb[0].mxu0
    %v301 = vpop.f32.mrb[0].mxu0
    %v302 = vadd.f32 0.0, %v301
    %v303 = vpop.f32.mrb[0].mxu0
    %304 = vmatprep.mubr.bf16.mxu0 0
    %305 = vmatmul.mubr.bf16.gmra.mrb[0].mxu0 %v190
    %v306 = vpop.f32.mrb[0].mxu0
    %v307 = vadd.f32 0.0, %v306
    %v308 = vpop.f32.mrb[0].mxu0
    %v309 = vpop.f32.mrb[0].mxu0
    %v310 = vadd.f32 0.0, %v309
    %v311 = vpop.f32.mrb[0].mxu0
    %312 = vmatprep.mubr.bf16.mxu0 0
    %313 = vmatmul.mubr.bf16.gmra.mrb[0].mxu0 %v193
    %v314 = vpop.f32.mrb[0].mxu0
    %v315 = vadd.f32 0.0, %v314
    %v316 = vpop.f32.mrb[0].mxu0
    %v317 = vpop.f32.mrb[0].mxu0
    %v318 = vadd.f32 0.0, %v317
    %v319 = vpop.f32.mrb[0].mxu0
    %320 = vmatprep.mubr.bf16.mxu0 0
    %321 = vmatmul.mubr.bf16.gmra.mrb[0].mxu0 %v196
    %v322 = vpop.f32.mrb[0].mxu0
    %v323 = vadd.f32 0.0, %v322
    %v324 = vpop.f32.mrb[0].mxu0
    %v325 = vpop.f32.mrb[0].mxu0
    %v326 = vadd.f32 0.0, %v325
    %v327 = vpop.f32.mrb[0].mxu0
    %328 = vmatprep.mubr.bf16.mxu0 0
    %329 = vmatmul.mubr.bf16.gmra.mrb[0].mxu0 %v199
    %v330 = vpop.f32.mrb[0].mxu0
    %v331 = vadd.f32 0.0, %v330
    %v332 = vpop.f32.mrb[0].mxu0
    %v333 = vpop.f32.mrb[0].mxu0
    %v334 = vadd.f32 0.0, %v333
    %v335 = vpop.f32.mrb[0].mxu0
    %336 = vmatprep.mubr.bf16.mxu0 0
    %337 = vmatmul.mubr.bf16.gmra.mrb[0].mxu0 %v202
    %v338 = vpop.f32.mrb[0].mxu0
    %v339 = vadd.f32 0.0, %v338
    %v340 = vpop.f32.mrb[0].mxu0
    %v341 = vpop.f32.mrb[0].mxu0
    %v342 = vadd.f32 0.0, %v341
    %v343 = vpop.f32.mrb[0].mxu0
    %344 = vmatprep.mubr.bf16.mxu0 0
    %345 = vmatmul.mubr.bf16.gmra.mrb[0].mxu0 %v205
    %v346 = vpop.f32.mrb[0].mxu0
    %v347 = vadd.f32 0.0, %v346
    %v348 = vpop.f32.mrb[0].mxu0
    %v349 = vpop.f32.mrb[0].mxu0
    %v350 = vadd.f32 0.0, %v349
    %v351 = vpop.f32.mrb[0].mxu0
    %352 = vmatprep.mubr.bf16.mxu0 0
    %353 = vmatmul.mubr.bf16.gmra.mrb[0].mxu0 %v208
    %v354 = vpop.f32.mrb[0].mxu0
    %v355 = vadd.f32 0.0, %v354
    %v356 = vpop.f32.mrb[0].mxu0
    %v357 = vpop.f32.mrb[0].mxu0
    %v358 = vadd.f32 0.0, %v357
    %v359 = vpop.f32.mrb[0].mxu0
    %360 = vmatprep.mubr.bf16.mxu0 0
    %361 = vmatmul.mubr.bf16.gmra.mrb[0].mxu0 %v211
    %v362 = vpop.f32.mrb[0].mxu0
    %v363 = vadd.f32 0.0, %v362
    %v364 = vpop.f32.mrb[0].mxu0
    %v365 = vpop.f32.mrb[0].mxu0
    %v366 = vadd.f32 0.0, %v365
    %v367 = vpop.f32.mrb[0].mxu0
    %368 = vmatprep.mubr.bf16.mxu0 0
    %369 = vmatmul.mubr.bf16.gmra.mrb[0].mxu0 %v214
    %v370 = vpop.f32.mrb[0].mxu0
    %v371 = vadd.f32 0.0, %v370
    %v372 = vpop.f32.mrb[0].mxu0
    %v373 = vpop.f32.mrb[0].mxu0
    %v374 = vadd.f32 0.0, %v373
    %v375 = vpop.f32.mrb[0].mxu0
    %376 = vdwg.mxu0
    %v377 = vld [vmem:[%s2] sm:$0x1]
    %378 = vmatprep.subr.mxu0 0.0
    %379 = vmatpush1.xpose.msra.mxu0 %v251
    %380 = vmatprep.subr.mxu0 0.0
    %381 = vmatpush1.xpose.msra.mxu0 %v254
    %382 = vmatprep.subr.mxu0 0.0
    %383 = vmatpush1.xpose.msra.mxu0 %v259
    %384 = vmatprep.subr.mxu0 0.0
    %385 = vmatpush1.xpose.msra.mxu0 %v262
    %386 = vmatprep.subr.mxu0 0.0
    %387 = vmatpush1.xpose.msra.mxu0 %v267
    %388 = vmatprep.subr.mxu0 0.0
    %389 = vmatpush1.xpose.msra.mxu0 %v270
    %390 = vmatprep.subr.mxu0 0.0
    %391 = vmatpush1.xpose.msra.mxu0 %v275
    %392 = vmatprep.subr.mxu0 0.0
    %393 = vmatpush1.xpose.msra.mxu0 %v278
    %394 = vmatprep.subr.mxu0 0.0
    %395 = vmatpush1.xpose.msra.mxu0 %v283
    %396 = vmatprep.subr.mxu0 0.0
    %397 = vmatpush1.xpose.msra.mxu0 %v286
    %398 = vmatprep.subr.mxu0 0.0
    %399 = vmatpush1.xpose.msra.mxu0 %v291
    %400 = vmatprep.subr.mxu0 0.0
    %401 = vmatpush1.xpose.msra.mxu0 %v294
    %402 = vmatprep.subr.mxu0 0.0
    %403 = vmatpush1.xpose.msra.mxu0 %v299
    %404 = vmatprep.subr.mxu0 0.0
    %405 = vmatpush1.xpose.msra.mxu0 %v302
    %406 = vmatprep.subr.mxu0 0.0
    %407 = vmatpush1.xpose.msra.mxu0 %v307
    %408 = vmatprep.subr.mxu0 0.0
    %409 = vmatpush1.xpose.msra.mxu0 %v310
    %410 = vmatprep.subr.mxu0 0.0
    %411 = vmatpush1.xpose.msra.mxu0 %v315
    %412 = vmatprep.subr.mxu0 0.0
    %413 = vmatpush1.xpose.msra.mxu0 %v318
    %414 = vmatprep.subr.mxu0 0.0
    %415 = vmatpush1.xpose.msra.mxu0 %v323
    %416 = vmatprep.subr.mxu0 0.0
    %417 = vmatpush1.xpose.msra.mxu0 %v326
    %418 = vmatprep.subr.mxu0 0.0
    %419 = vmatpush1.xpose.msra.mxu0 %v331
    %420 = vmatprep.subr.mxu0 0.0
    %421 = vmatpush1.xpose.msra.mxu0 %v334
    %422 = vmatprep.subr.mxu0 0.0
    %423 = vmatpush1.xpose.msra.mxu0 %v339
    %424 = vmatprep.subr.mxu0 0.0
    %425 = vmatpush1.xpose.msra.mxu0 %v342
    %426 = vmatprep.subr.mxu0 0.0
    %427 = vmatpush1.xpose.msra.mxu0 %v347
    %428 = vmatprep.subr.mxu0 0.0
    %429 = vmatpush1.xpose.msra.mxu0 %v350
    %430 = vmatprep.subr.mxu0 0.0
    %431 = vmatpush1.xpose.msra.mxu0 %v355
    %432 = vmatprep.subr.mxu0 0.0
    %433 = vmatpush1.xpose.msra.mxu0 %v358
    %434 = vmatprep.subr.mxu0 0.0
    %435 = vmatpush1.xpose.msra.mxu0 %v363
    %436 = vmatprep.subr.mxu0 0.0
    %437 = vmatpush1.xpose.msra.mxu0 %v366
    %438 = vmatprep.subr.mxu0 0.0
    %439 = vmatpush1.xpose.msra.mxu0 %v371
    %440 = vmatprep.subr.mxu0 0.0
    %441 = vmatpush1.xpose.msra.mxu0 %v374
    %442 = vmatprep.mubr.f32.mxu0 0.0
    %443 = vmatmul.mubr.f32.gmra.mrb[0].mxu0 %v377
    %v444 = vpop.f32.mrb[0].mxu0
    %v445 = vadd.f32 0.0, %v444
    %v446 = vpop.f32.mrb[0].mxu0
    %v447 = vadd.f32 0.0, %v446
    %448 = vdwg.mxu0
    %v451 = vcombine.low %v445, %v447
    %v453 = vunpack.c.l.s4 1966171168
    %v454 = vunpack.c.0.s8 %v453
    %v455 = vlaneseq
    %v456 = vshrl.u32 %v455, 7
    %v457 = vsub.s32 %v454, %v456
    %v458 = vrot.slane %v451, %v457
    %v460 = vunpack.c.l.s4 1966171168
    %v461 = vunpack.c.0.s8 %v460
    %v462 = vlaneseq
    %v463 = vshrl.u32 %v462, 7
    %v464 = vsub.s32 %v461, %v463
    %v465 = vrot.slane %v458, %v464
    %v467 = vlaneseq
    %vm468 = vcmp.ge.s32.totalorder %v467, 0
    %vm469 = vcmp.lt.s32.totalorder %v467, 256
    %vm470 = vmand %vm468, %vm469
    %471 = vst.msk [vmem:[#allocation4] sm:$0x3] %vm470, %v465
    %v472 = vld [vmem:[%s3] sm:$0x1]
    %v474 = vlaneseq
    %v475 = vshrl.u32 %v474, 7
    %v476 = vsub.s32 0, %v475
    %v477 = vrot.slane %v472, %v476
    %v479 = vmul.f32 %v251, %v477
    %v480 = vmul.f32 %v254, %v477
    %v481 = vmul.f32 %v259, %v477
    %v482 = vmul.f32 %v262, %v477
    %v483 = vmul.f32 %v267, %v477
    %v484 = vmul.f32 %v270, %v477
    %v485 = vmul.f32 %v275, %v477
    %v486 = vmul.f32 %v278, %v477
    %v487 = vmul.f32 %v283, %v477
    %v488 = vmul.f32 %v286, %v477
    %v489 = vmul.f32 %v291, %v477
    %v490 = vmul.f32 %v294, %v477
    %v491 = vmul.f32 %v299, %v477
    %v492 = vmul.f32 %v302, %v477
    %v493 = vmul.f32 %v307, %v477
    %v494 = vmul.f32 %v310, %v477
    %v495 = vmul.f32 %v315, %v477
    %v496 = vmul.f32 %v318, %v477
    %v497 = vmul.f32 %v323, %v477
    %v498 = vmul.f32 %v326, %v477
    %v499 = vmul.f32 %v331, %v477
    %v500 = vmul.f32 %v334, %v477
    %v501 = vmul.f32 %v339, %v477
    %v502 = vmul.f32 %v342, %v477
    %v503 = vmul.f32 %v347, %v477
    %v504 = vmul.f32 %v350, %v477
    %v505 = vmul.f32 %v355, %v477
    %v506 = vmul.f32 %v358, %v477
    %v507 = vmul.f32 %v363, %v477
    %v508 = vmul.f32 %v366, %v477
    %v509 = vmul.f32 %v371, %v477
    %v510 = vmul.f32 %v374, %v477
    %511 = vadd.xlane.f32.xlu0 %v479
    %v512 = vpop.xlane.xlu0 %511
    %513 = vadd.xlane.f32.xlu0 %v480
    %v514 = vpop.xlane.xlu0 %513
    %515 = vadd.xlane.f32.xlu0 %v481
    %v516 = vpop.xlane.xlu0 %515
    %517 = vadd.xlane.f32.xlu0 %v482
    %v518 = vpop.xlane.xlu0 %517
    %519 = vadd.xlane.f32.xlu0 %v483
    %v520 = vpop.xlane.xlu0 %519
    %521 = vadd.xlane.f32.xlu0 %v484
    %v522 = vpop.xlane.xlu0 %521
    %523 = vadd.xlane.f32.xlu0 %v485
    %v524 = vpop.xlane.xlu0 %523
    %525 = vadd.xlane.f32.xlu0 %v486
    %v526 = vpop.xlane.xlu0 %525
    %527 = vadd.xlane.f32.xlu0 %v487
    %v528 = vpop.xlane.xlu0 %527
    %529 = vadd.xlane.f32.xlu0 %v488
    %v530 = vpop.xlane.xlu0 %529
    %531 = vadd.xlane.f32.xlu0 %v489
    %v532 = vpop.xlane.xlu0 %531
    %533 = vadd.xlane.f32.xlu0 %v490
    %v534 = vpop.xlane.xlu0 %533
    %535 = vadd.xlane.f32.xlu0 %v491
    %v536 = vpop.xlane.xlu0 %535
    %537 = vadd.xlane.f32.xlu0 %v492
    %v538 = vpop.xlane.xlu0 %537
    %539 = vadd.xlane.f32.xlu0 %v493
    %v540 = vpop.xlane.xlu0 %539
    %541 = vadd.xlane.f32.xlu0 %v494
    %v542 = vpop.xlane.xlu0 %541
    %543 = vadd.xlane.f32.xlu0 %v495
    %v544 = vpop.xlane.xlu0 %543
    %545 = vadd.xlane.f32.xlu0 %v496
    %v546 = vpop.xlane.xlu0 %545
    %547 = vadd.xlane.f32.xlu0 %v497
    %v548 = vpop.xlane.xlu0 %547
    %549 = vadd.xlane.f32.xlu0 %v498
    %v550 = vpop.xlane.xlu0 %549
    %551 = vadd.xlane.f32.xlu0 %v499
    %v552 = vpop.xlane.xlu0 %551
    %553 = vadd.xlane.f32.xlu0 %v500
    %v554 = vpop.xlane.xlu0 %553
    %555 = vadd.xlane.f32.xlu0 %v501
    %v556 = vpop.xlane.xlu0 %555
    %557 = vadd.xlane.f32.xlu0 %v502
    %v558 = vpop.xlane.xlu0 %557
    %559 = vadd.xlane.f32.xlu0 %v503
    %v560 = vpop.xlane.xlu0 %559
    %561 = vadd.xlane.f32.xlu0 %v504
    %v562 = vpop.xlane.xlu0 %561
    %563 = vadd.xlane.f32.xlu0 %v505
    %v564 = vpop.xlane.xlu0 %563
    %565 = vadd.xlane.f32.xlu0 %v506
    %v566 = vpop.xlane.xlu0 %565
    %567 = vadd.xlane.f32.xlu0 %v507
    %v568 = vpop.xlane.xlu0 %567
    %569 = vadd.xlane.f32.xlu0 %v508
    %v570 = vpop.xlane.xlu0 %569
    %571 = vadd.xlane.f32.xlu0 %v509
    %v572 = vpop.xlane.xlu0 %571
    %573 = vadd.xlane.f32.xlu0 %v510
    %v574 = vpop.xlane.xlu0 %573
    %vm575 = vcmask 7168
    %576 = vst.msk [vmem:[%s6] sm:$0xff] %vm575, %v512
    %577 = vst.msk [vmem:[%s6 + $0x8] sm:$0xff] %vm575, %v514
    %578 = vst.msk [vmem:[%s6 + $0x10] sm:$0xff] %vm575, %v516
    %579 = vst.msk [vmem:[%s6 + $0x18] sm:$0xff] %vm575, %v518
    %580 = vst.msk [vmem:[%s6 + $0x20] sm:$0xff] %vm575, %v520
    %581 = vst.msk [vmem:[%s6 + $0x28] sm:$0xff] %vm575, %v522
    %582 = vst.msk [vmem:[%s6 + $0x30] sm:$0xff] %vm575, %v524
    %583 = vst.msk [vmem:[%s6 + $0x38] sm:$0xff] %vm575, %v526
    %584 = vst.msk [vmem:[%s6 + $0x40] sm:$0xff] %vm575, %v528
    %585 = vst.msk [vmem:[%s6 + $0x48] sm:$0xff] %vm575, %v530
    %586 = vst.msk [vmem:[%s6 + $0x50] sm:$0xff] %vm575, %v532
    %587 = vst.msk [vmem:[%s6 + $0x58] sm:$0xff] %vm575, %v534
    %588 = vst.msk [vmem:[%s6 + $0x60] sm:$0xff] %vm575, %v536
    %589 = vst.msk [vmem:[%s6 + $0x68] sm:$0xff] %vm575, %v538
    %590 = vst.msk [vmem:[%s6 + $0x70] sm:$0xff] %vm575, %v540
    %591 = vst.msk [vmem:[%s6 + $0x78] sm:$0xff] %vm575, %v542
    %592 = vst.msk [vmem:[%s6 + $0x80] sm:$0xff] %vm575, %v544
    %593 = vst.msk [vmem:[%s6 + $0x88] sm:$0xff] %vm575, %v546
    %594 = vst.msk [vmem:[%s6 + $0x90] sm:$0xff] %vm575, %v548
    %595 = vst.msk [vmem:[%s6 + $0x98] sm:$0xff] %vm575, %v550
    %596 = vst.msk [vmem:[%s6 + $0xa0] sm:$0xff] %vm575, %v552
    %597 = vst.msk [vmem:[%s6 + $0xa8] sm:$0xff] %vm575, %v554
    %598 = vst.msk [vmem:[%s6 + $0xb0] sm:$0xff] %vm575, %v556
    %599 = vst.msk [vmem:[%s6 + $0xb8] sm:$0xff] %vm575, %v558
    %600 = vst.msk [vmem:[%s6 + $0xc0] sm:$0xff] %vm575, %v560
    %601 = vst.msk [vmem:[%s6 + $0xc8] sm:$0xff] %vm575, %v562
    %602 = vst.msk [vmem:[%s6 + $0xd0] sm:$0xff] %vm575, %v564
    %603 = vst.msk [vmem:[%s6 + $0xd8] sm:$0xff] %vm575, %v566
    %604 = vst.msk [vmem:[%s6 + $0xe0] sm:$0xff] %vm575, %v568
    %605 = vst.msk [vmem:[%s6 + $0xe8] sm:$0xff] %vm575, %v570
    %606 = vst.msk [vmem:[%s6 + $0xf0] sm:$0xff] %vm575, %v572
    %607 = vst.msk [vmem:[%s6 + $0xf8] sm:$0xff] %vm575, %v574
    %v608 = vpack.c.bf16 %v254, %v251
    %v609 = vpack.c.bf16 %v262, %v259
    %v610 = vpack.c.bf16 %v270, %v267
    %v611 = vpack.c.bf16 %v278, %v275
    %v612 = vpack.c.bf16 %v286, %v283
    %v613 = vpack.c.bf16 %v294, %v291
    %v614 = vpack.c.bf16 %v302, %v299
    %v615 = vpack.c.bf16 %v310, %v307
    %v616 = vpack.c.bf16 %v318, %v315
    %v617 = vpack.c.bf16 %v326, %v323
    %v618 = vpack.c.bf16 %v334, %v331
    %v619 = vpack.c.bf16 %v342, %v339
    %v620 = vpack.c.bf16 %v350, %v347
    %v621 = vpack.c.bf16 %v358, %v355
    %v622 = vpack.c.bf16 %v366, %v363
    %v623 = vpack.c.bf16 %v374, %v371
    %v640 = vunpack.c.l.b16 %v608
    %v641 = vunpack.c.h.b16 %v608
    %v642 = vunpack.c.l.b16 %v609
    %v643 = vunpack.c.h.b16 %v609
    %v644 = vunpack.c.l.b16 %v610
    %v645 = vunpack.c.h.b16 %v610
    %v646 = vunpack.c.l.b16 %v611
    %v647 = vunpack.c.h.b16 %v611
    %v648 = vunpack.c.l.b16 %v612
    %v649 = vunpack.c.h.b16 %v612
    %v650 = vunpack.c.l.b16 %v613
    %v651 = vunpack.c.h.b16 %v613
    %v652 = vunpack.c.l.b16 %v614
    %v653 = vunpack.c.h.b16 %v614
    %v654 = vunpack.c.l.b16 %v615
    %v655 = vunpack.c.h.b16 %v615
    %v656 = vunpack.c.l.b16 %v616
    %v657 = vunpack.c.h.b16 %v616
    %v658 = vunpack.c.l.b16 %v617
    %v659 = vunpack.c.h.b16 %v617
    %v660 = vunpack.c.l.b16 %v618
    %v661 = vunpack.c.h.b16 %v618
    %v662 = vunpack.c.l.b16 %v619
    %v663 = vunpack.c.h.b16 %v619
    %v664 = vunpack.c.l.b16 %v620
    %v665 = vunpack.c.h.b16 %v620
    %v666 = vunpack.c.l.b16 %v621
    %v667 = vunpack.c.h.b16 %v621
    %v668 = vunpack.c.l.b16 %v622
    %v669 = vunpack.c.h.b16 %v622
    %v670 = vunpack.c.l.b16 %v623
    %v671 = vunpack.c.h.b16 %v623
    %v672 = vpack.c.b16 %v640, %v640
    %v673 = vpack.c.b16 %v641, %v641
    %v674 = vpack.c.b16 %v642, %v642
    %v675 = vpack.c.b16 %v643, %v643
    %v676 = vpack.c.b16 %v644, %v644
    %v677 = vpack.c.b16 %v645, %v645
    %v678 = vpack.c.b16 %v646, %v646
    %v679 = vpack.c.b16 %v647, %v647
    %v680 = vpack.c.b16 %v648, %v648
    %v681 = vpack.c.b16 %v649, %v649
    %v682 = vpack.c.b16 %v650, %v650
    %v683 = vpack.c.b16 %v651, %v651
    %v684 = vpack.c.b16 %v652, %v652
    %v685 = vpack.c.b16 %v653, %v653
    %v686 = vpack.c.b16 %v654, %v654
    %v687 = vpack.c.b16 %v655, %v655
    %v688 = vpack.c.b16 %v656, %v656
    %v689 = vpack.c.b16 %v657, %v657
    %v690 = vpack.c.b16 %v658, %v658
    %v691 = vpack.c.b16 %v659, %v659
    %v692 = vpack.c.b16 %v660, %v660
    %v693 = vpack.c.b16 %v661, %v661
    %v694 = vpack.c.b16 %v662, %v662
    %v695 = vpack.c.b16 %v663, %v663
    %v696 = vpack.c.b16 %v664, %v664
    %v697 = vpack.c.b16 %v665, %v665
    %v698 = vpack.c.b16 %v666, %v666
    %v699 = vpack.c.b16 %v667, %v667
    %v700 = vpack.c.b16 %v668, %v668
    %v701 = vpack.c.b16 %v669, %v669
    %v702 = vpack.c.b16 %v670, %v670
    %v703 = vpack.c.b16 %v671, %v671
    %736 = vst [vmem:[#allocation2] sm:$0xf] %v672
    %737 = vst [vmem:[#allocation2 + $0x4] sm:$0xf] %v673
    %738 = vst [vmem:[#allocation2 + $0x8] sm:$0xf] %v674
    %739 = vst [vmem:[#allocation2 + $0xc] sm:$0xf] %v675
    %740 = vst [vmem:[#allocation2 + $0x10] sm:$0xf] %v676
    %741 = vst [vmem:[#allocation2 + $0x14] sm:$0xf] %v677
    %742 = vst [vmem:[#allocation2 + $0x18] sm:$0xf] %v678
    %743 = vst [vmem:[#allocation2 + $0x1c] sm:$0xf] %v679
    %744 = vst [vmem:[#allocation2 + $0x20] sm:$0xf] %v680
    %745 = vst [vmem:[#allocation2 + $0x24] sm:$0xf] %v681
    %746 = vst [vmem:[#allocation2 + $0x28] sm:$0xf] %v682
    %747 = vst [vmem:[#allocation2 + $0x2c] sm:$0xf] %v683
    %748 = vst [vmem:[#allocation2 + $0x30] sm:$0xf] %v684
    %749 = vst [vmem:[#allocation2 + $0x34] sm:$0xf] %v685
    %750 = vst [vmem:[#allocation2 + $0x38] sm:$0xf] %v686
    %751 = vst [vmem:[#allocation2 + $0x3c] sm:$0xf] %v687
    %752 = vst [vmem:[#allocation2 + $0x40] sm:$0xf] %v688
    %753 = vst [vmem:[#allocation2 + $0x44] sm:$0xf] %v689
    %754 = vst [vmem:[#allocation2 + $0x48] sm:$0xf] %v690
    %755 = vst [vmem:[#allocation2 + $0x4c] sm:$0xf] %v691
    %756 = vst [vmem:[#allocation2 + $0x50] sm:$0xf] %v692
    %757 = vst [vmem:[#allocation2 + $0x54] sm:$0xf] %v693
    %758 = vst [vmem:[#allocation2 + $0x58] sm:$0xf] %v694
    %759 = vst [vmem:[#allocation2 + $0x5c] sm:$0xf] %v695
    %760 = vst [vmem:[#allocation2 + $0x60] sm:$0xf] %v696
    %761 = vst [vmem:[#allocation2 + $0x64] sm:$0xf] %v697
    %762 = vst [vmem:[#allocation2 + $0x68] sm:$0xf] %v698
    %763 = vst [vmem:[#allocation2 + $0x6c] sm:$0xf] %v699
    %764 = vst [vmem:[#allocation2 + $0x70] sm:$0xf] %v700
    %765 = vst [vmem:[#allocation2 + $0x74] sm:$0xf] %v701
    %766 = vst [vmem:[#allocation2 + $0x78] sm:$0xf] %v702
    %767 = vst [vmem:[#allocation2 + $0x7c] sm:$0xf] %v703
    // Predicated region
    $region18: #{tpu_custom_call.1} parent=1 // pred_check
      _
    $region19: #{tpu_custom_call.1} parent=1 // pred_check_branch
      %769 = sbr.rel (0) target = $region21
    $region20: #{tpu_custom_call.1} parent=1 // pred_region
      %s771 = ssub.s32 2048, 2048
      %772 = vsyncadd [#allocation3], %s771
      %s773 = sshll.u32 [#allocation2], 4
      %s774 = int_to_ptr.vmem [resolvable:$true] %s773
      %779 = dma.vmem_to_hbm [thread:$0]  %s774, 2048, %s4, [#allocation3], 64, 64, 4
    $region21: #{tpu_custom_call.1} parent=1 // pred_fallthru
      _
    // Predicated region
    $region22: #{tpu_custom_call.1} parent=1 // pred_check
      _
    $region23: #{tpu_custom_call.1} parent=1 // pred_check_branch
      %781 = sbr.rel (0) target = $region25
    $region24: #{tpu_custom_call.1} parent=1 // pred_region
      %s783 = ssub.s32 32, 32
      %784 = vsyncadd [#allocation5], %s783
      %s786 = sshll.u32 [#allocation4], 4
      %s787 = int_to_ptr.vmem [resolvable:$true] %s786
      %789 = dma.vmem_to_hbm [thread:$0]  %s787, 32, %s5, [#allocation5]
    $region25: #{tpu_custom_call.1} parent=1 // pred_fallthru
      _
    // Predicated region
    $region26: #{tpu_custom_call.1} parent=1 // pred_check
      _
    $region27: #{tpu_custom_call.1} parent=1 // pred_check_branch
      %791 = sbr.rel (0) target = $region29
    $region28: #{tpu_custom_call.1} parent=1 // pred_region
      _
    $region29: #{tpu_custom_call.1} parent=1 // pred_fallthru
      _
    // Predicated region
    $region30: #{tpu_custom_call.1} parent=1 // pred_check
      _
    $region31: #{tpu_custom_call.1} parent=1 // pred_check_branch
      %793 = sbr.rel (0) target = $region33
    $region32: #{tpu_custom_call.1} parent=1 // pred_region
      %794 = dma.done [#allocation3], 2048
    $region33: #{tpu_custom_call.1} parent=1 // pred_fallthru
      _
    // Predicated region
    $region34: #{tpu_custom_call.1} parent=1 // pred_check
      _
    $region35: #{tpu_custom_call.1} parent=1 // pred_check_branch
      %796 = sbr.rel (0) target = $region37
    $region36: #{tpu_custom_call.1} parent=1 // pred_region
      %797 = dma.done [#allocation5], 32
    $region37: #{tpu_custom_call.1} parent=1 // pred_fallthru
      _
    // Predicated region
    $region38: #{tpu_custom_call.1} parent=1 // pred_check
      _
    $region39: #{tpu_custom_call.1} parent=1 // pred_check_branch
      %799 = sbr.rel (0) target = $region41
    $region40: #{tpu_custom_call.1} parent=1 // pred_region
      _
    $region41: #{tpu_custom_call.1} parent=1 // pred_fallthru
      _
    %800 = vsyncpa [#allocation3], 1
    %801 = vsyncpa [#allocation5], 1

</llo_original>
